<compile_context>
chip_gen: v7x
topology: tpu7x:2x2x1
jax: 0.10.0
libtpu: 0.0.40
codegen_flags: <defaults>
</compile_context>

<pallas_src>
import functools

import jax
import jax.numpy as jnp
from jax.experimental import pallas as pl
from jax.experimental.pallas import tpu as pltpu

BN_EPS1 = 1e-5  # nn.BatchNorm1d default eps (bn1)


def _round_up(n, m):
    return ((n + m - 1) // m) * m


def _cdiv(a, b):
    return (a + b - 1) // b


def _vmem_budget_bytes():
    """~75% of physical per-core VMEM (v7x: ~48 MiB, v5e/v6e: ~96 MiB); conservative fallback."""
    phys = 64 * 1024 * 1024  # assume v7x (smallest VMEM) if the query fails
    try:
        info = pltpu.get_tpu_info()
        phys = int(getattr(info, "vmem_capacity_bytes", phys)) or phys
    except Exception:
        pass
    return int(phys * 0.75)


# --------------------------------------------------------------------------------------
# Kernels
# --------------------------------------------------------------------------------------
def _dense_res_resident_kernel(x_ref, w1_ref, w2_ref, p_ref, o_ref, *, compute_dtype):
    """Resident-weights path: one (TB, Fp) batch tile per grid step, full Fp in VMEM.

    p_ref rows: 0=b1, 1=bn1_scale, 2=bn1_shift, 3=b2, 4=bn2_scale, 5=bn2_shift.
    """
    x32 = x_ref[...].astype(jnp.float32)                     # residual path in f32

    # ---- block 1: Linear -> ReLU -> residual -> folded BatchNorm (eval) ----
    y = jnp.dot(x_ref[...], w1_ref[...], preferred_element_type=jnp.float32)
    y = jnp.maximum(y + p_ref[0:1, :], 0.0)
    z = x32 + y
    z = z * p_ref[1:2, :] + p_ref[2:3, :]

    # Dropout1d in eval mode is the identity.

    # ---- block 2: Linear -> ReLU -> residual -> folded BatchNorm (eval) ----
    y2 = jnp.dot(z.astype(compute_dtype), w2_ref[...], preferred_element_type=jnp.float32)
    y2 = jnp.maximum(y2 + p_ref[3:4, :], 0.0)
    z2 = z + y2
    z2 = z2 * p_ref[4:5, :] + p_ref[5:6, :]

    o_ref[...] = z2.astype(o_ref.dtype)


def _dense_res_stream_kernel(x_ref, w1_hbm, w2_hbm, p_ref, o_ref,
                             z32_ref, zlo_ref, wbuf, sem,
                             *, n_cols, tn, compute_dtype):
    """Weight-streaming path for large feature dims (weights do not fit VMEM).

    w1_hbm / w2_hbm: (n_cols, Fp, tn) contiguous column blocks in HBM (memory_space=ANY),
    manually double-buffered into `wbuf` with DMA semaphores `sem`.
    Steps [0, n_cols):       z = bn1(x + relu(x @ w1 + b1)), written into VMEM scratch.
    Steps [n_cols, 2*n_cols): out = bn2(z + relu(z @ w2 + b2)).
    """
    total = 2 * n_cols

    def fetch(src_hbm, j, slot):
        pltpu.make_async_copy(src_hbm.at[j], wbuf.at[slot], sem.at[slot]).start()

    fetch(w1_hbm, 0, 0)                                       # prime slot 0

    @pl.loop(0, total)
    def _(step):
        slot = step & 1
        nslot = 1 - slot
        # Wait for the current slot (descriptor shape matches regardless of source).
        pltpu.make_async_copy(w1_hbm.at[0], wbuf.at[slot], sem.at[slot]).wait()

        # Prefetch the next weight column block into the other slot.
        nxt = step + 1

        @pl.when(nxt < n_cols)
        def _():
            fetch(w1_hbm, nxt, nslot)

        @pl.when(jnp.logical_and(nxt >= n_cols, nxt < total))
        def _():
            fetch(w2_hbm, jnp.maximum(nxt - n_cols, 0), nslot)

        w_blk = wbuf[slot]                                    # (Fp, tn) compute_dtype

        @pl.when(step < n_cols)
        def _():                                              # ---- pass 1: build z ----
            col = pl.multiple_of(step * tn, tn)
            cs = pl.ds(col, tn)
            y = jnp.dot(x_ref[...], w_blk, preferred_element_type=jnp.float32)
            y = jnp.maximum(y + p_ref[0:1, cs], 0.0)
            z = x_ref[:, cs].astype(jnp.float32) + y
            z = z * p_ref[1:2, cs] + p_ref[2:3, cs]
            z32_ref[:, cs] = z                                # f32 copy for the residual
            zlo_ref[:, cs] = z.astype(compute_dtype)          # matmul-input copy

        @pl.when(step >= n_cols)
        def _():                                              # ---- pass 2: build out ----
            col = pl.multiple_of(jnp.maximum(step - n_cols, 0) * tn, tn)
            cs = pl.ds(col, tn)
            y2 = jnp.dot(zlo_ref[...], w_blk, preferred_element_type=jnp.float32)
            y2 = jnp.maximum(y2 + p_ref[3:4, cs], 0.0)
            z2 = z32_ref[:, cs] + y2
            z2 = z2 * p_ref[4:5, cs] + p_ref[5:6, cs]
            o_ref[:, cs] = z2.astype(o_ref.dtype)


# --------------------------------------------------------------------------------------
# One-time parameter preparation (hoisted out of the forward path)
# --------------------------------------------------------------------------------------
def prepare_dense_res_params(params, *, compute_dtype=jnp.bfloat16,
                             force_stream=False, stream_tn=None):
    """Fold BN, pad/transpose/cast weights once and decide resident vs streaming layout."""
    (w1, b1, w2, b2, g1, be1, m1, v1, g2, be2, m2, v2) = params
    F = w1.shape[0]

    eps1 = BN_EPS1
    eps2 = float(F)   # quirk: nn.BatchNorm1d(feat_dim, feat_dim) -> eps = feat_dim

    # Lane-dense feature padding; 256-aligned (v6e/v7x MXU width) once past one 128 tile.
    Fp = 128 if F <= 128 else _round_up(F, 256)
    pad_f = Fp - F
    wbytes = jnp.dtype(compute_dtype).itemsize

    vmem_cap = _vmem_budget_bytes()
    resident_w_bytes = 2 * Fp * Fp * wbytes                   # both weights, single-buffered
    stream = bool(force_stream) or (resident_w_bytes > int(0.7 * vmem_cap))

    # Fold BN (eval): scale = gamma / sqrt(var + eps); shift = beta - mean * scale.
    s1 = g1 * jax.lax.rsqrt(v1.astype(jnp.float32) + eps1)
    t1 = be1 - m1 * s1
    s2 = g2 * jax.lax.rsqrt(v2.astype(jnp.float32) + eps2)
    t2 = be2 - m2 * s2

    def _pad_vec(v, fill):
        return jnp.pad(v.astype(jnp.float32), (0, pad_f), constant_values=fill)

    # Padded columns stay exactly zero: bias 0, BN scale 1, BN shift 0.
    packed = jnp.stack([
        _pad_vec(b1, 0.0), _pad_vec(s1, 1.0), _pad_vec(t1, 0.0),
        _pad_vec(b2, 0.0), _pad_vec(s2, 1.0), _pad_vec(t2, 0.0),
        jnp.zeros((Fp,), jnp.float32), jnp.zeros((Fp,), jnp.float32),
    ])                                                        # (8, Fp) aligned param tile

    # torch Linear computes x @ W.T + b -> store W pre-transposed to (F_in, F_out).
    w1t = jnp.pad(w1.T, ((0, pad_f), (0, pad_f))).astype(compute_dtype)
    w2t = jnp.pad(w2.T, ((0, pad_f), (0, pad_f))).astype(compute_dtype)

    tn = None
    n_cols = None
    if stream:
        if stream_tn is not None:
            tn = int(stream_tn)
        else:
            for cand in (512, 256, 128):
                if Fp % cand == 0:
                    tn = cand
                    break
        assert tn is not None and Fp % tn == 0
        n_cols = Fp // tn
        # (n_cols, Fp, tn) layout -> each per-block DMA is a plain contiguous copy.
        w1t = w1t.reshape(Fp, n_cols, tn).transpose(1, 0, 2)
        w2t = w2t.reshape(Fp, n_cols, tn).transpose(1, 0, 2)

    return dict(F=F, Fp=Fp, stream=stream, tn=tn, n_cols=n_cols,
                compute_dtype=compute_dtype, wbytes=wbytes, vmem_cap=vmem_cap,
                resident_w_bytes=resident_w_bytes,
                w1=w1t, w2=w2t, packed=packed)


# --------------------------------------------------------------------------------------
# Forward
# --------------------------------------------------------------------------------------
def dense_res_forward(x, prepared, *, block_b=None):
    """x: (B, ...) -> flattened to (B, F). Heavy math runs in one tiled Pallas kernel."""
    F = prepared["F"]
    Fp = prepared["Fp"]
    cdt = prepared["compute_dtype"]
    wbytes = prepared["wbytes"]
    cap = prepared["vmem_cap"]
    stream = prepared["stream"]

    B = x.shape[0]
    x2d = x.reshape(B, -1)                                    # glue: flatten(1)
    assert x2d.shape[1] == F, f"feature dim mismatch: {x2d.shape[1]} vs {F}"

    # ---- batch tiling plan (bounded padding waste) --------------------------
    if block_b is None:
        block_b = 1024 if Fp <= 512 else (512 if Fp <= 2048 else 256)
    n_tiles = max(1, _cdiv(B, block_b))
    TB = _round_up(_cdiv(B, n_tiles), 8)

    # ---- VMEM budget (includes in-kernel temporaries) -----------------------
    if stream:
        tn = prepared["tn"]
        fixed = 2 * Fp * tn * wbytes * 2 + 8 * Fp * 4         # wbuf (2 slots) + packed
        per_row = Fp * (2 * 2 * wbytes                        # x tile, double-buffered
                        + 2 * 4                               # out tile, double-buffered f32
                        + 4 + wbytes                          # z (f32) + z (compute dtype) scratch
                        + 8)                                  # live f32 temporaries (over-estimate)
    else:
        fixed = prepared["resident_w_bytes"] + 8 * Fp * 4     # weights + packed, single-buffered
        per_row = Fp * (2 * 2 * wbytes + 2 * 4 + 16)          # x/out double-buffered + ~4 f32 temps

    avail = cap - fixed - (4 << 20)
    if avail > 8 * per_row:
        TB = min(TB, max(8, (avail // per_row) // 8 * 8))
    TB = max(8, min(TB, 1024))
    Bp = _round_up(B, TB)

    # Megacore friendliness (v7x: 2 TCs): make sure there are >= 2 batch tiles when possible.
    if Bp // TB == 1 and TB >= 16:
        TB = _round_up(_cdiv(TB, 2), 8)
        Bp = _round_up(B, TB)

    grid = (Bp // TB,)

    # Activations streamed in compute dtype (bf16); epilogue stays f32 inside the kernel.
    x_p = jnp.pad(x2d.astype(jnp.float32), ((0, Bp - B), (0, Fp - F))).astype(cdt)

    est_vmem = fixed + per_row * TB + (4 << 20)
    vmem_limit = int(min(cap, max(32 * 1024 * 1024, est_vmem)))

    cost = pl.CostEstimate(
        flops=2 * 2 * Bp * Fp * Fp,
        transcendentals=0,
        bytes_accessed=(x_p.size * wbytes + Bp * Fp * 4
                        + 2 * Fp * Fp * wbytes * (grid[0] if stream else 1)
                        + prepared["packed"].size * 4),
    )

    single_buffer = pl.Buffered(1)   # constant index_map -> keep one resident VMEM copy

    if not stream:
        kernel = functools.partial(_dense_res_resident_kernel, compute_dtype=cdt)
        out = pl.pallas_call(
            kernel,
            out_shape=jax.ShapeDtypeStruct((Bp, Fp), jnp.float32),
            grid=grid,
            in_specs=[
                pl.BlockSpec((TB, Fp), lambda i: (i, 0)),                  # x: tiled over batch
                pl.BlockSpec((Fp, Fp), lambda i: (0, 0), pipeline_mode=single_buffer),
                pl.BlockSpec((Fp, Fp), lambda i: (0, 0), pipeline_mode=single_buffer),
                pl.BlockSpec((8, Fp), lambda i: (0, 0), pipeline_mode=single_buffer),
            ],
            out_specs=pl.BlockSpec((TB, Fp), lambda i: (i, 0)),
            compiler_params=pltpu.CompilerParams(
                dimension_semantics=("parallel",),
                vmem_limit_bytes=vmem_limit,
            ),
            cost_estimate=cost,
        )(x_p, prepared["w1"], prepared["w2"], prepared["packed"])
    else:
        tn = prepared["tn"]
        n_cols = prepared["n_cols"]
        kernel = functools.partial(_dense_res_stream_kernel,
                                   n_cols=n_cols, tn=tn, compute_dtype=cdt)
        out = pl.pallas_call(
            kernel,
            out_shape=jax.ShapeDtypeStruct((Bp, Fp), jnp.float32),
            grid=grid,
            in_specs=[
                pl.BlockSpec((TB, Fp), lambda i: (i, 0)),                  # x: tiled over batch
                pl.BlockSpec(memory_space=pl.ANY),                         # w1 column blocks (HBM)
                pl.BlockSpec(memory_space=pl.ANY),                         # w2 column blocks (HBM)
                pl.BlockSpec((8, Fp), lambda i: (0, 0), pipeline_mode=single_buffer),
            ],
            out_specs=pl.BlockSpec((TB, Fp), lambda i: (i, 0)),
            scratch_shapes=[
                pltpu.VMEM((TB, Fp), jnp.float32),      # z, f32 (residual path)
                pltpu.VMEM((TB, Fp), cdt),              # z, compute dtype (matmul input)
                pltpu.VMEM((2, Fp, tn), cdt),           # double-buffered weight column block
                pltpu.SemaphoreType.DMA((2,)),
            ],
            compiler_params=pltpu.CompilerParams(
                dimension_semantics=("parallel",),
                vmem_limit_bytes=vmem_limit,
            ),
            cost_estimate=cost,
        )(x_p, prepared["w1"], prepared["w2"], prepared["packed"])

    return out[:B, :F]


# --------------------------------------------------------------------------------------
# Test helpers
# --------------------------------------------------------------------------------------
def init_params(key, feat_dim):
    """Deterministic synthetic parameters matching the nn.Module shapes."""
    ks = jax.random.split(key, 8)
    F = feat_dim
    bound = 1.0 / jnp.sqrt(F)
    w1 = jax.random.uniform(ks[0], (F, F), jnp.float32, -bound, bound)
    b1 = jax.random.uniform(ks[1], (F,), jnp.float32, -bound, bound)
    w2 = jax.random.uniform(ks[2], (F, F), jnp.float32, -bound, bound)
    b2 = jax.random.uniform(ks[3], (F,), jnp.float32, -bound, bound)
    g1 = 1.0 + 0.1 * jax.random.normal(ks[4], (F,), jnp.float32)
    be1 = 0.1 * jax.random.normal(ks[5], (F,), jnp.float32)
    m1 = 0.05 * jax.random.normal(ks[6], (F,), jnp.float32)
    v1 = 1.0 + 0.1 * jnp.abs(jax.random.normal(ks[7], (F,), jnp.float32))
    g2 = 1.0 - 0.05 * jax.random.normal(ks[4], (F,), jnp.float32)
    be2 = -0.1 * jax.random.normal(ks[5], (F,), jnp.float32)
    m2 = -0.05 * jax.random.normal(ks[6], (F,), jnp.float32)
    v2 = 1.0 + 0.2 * jnp.abs(jax.random.normal(ks[7], (F,), jnp.float32))
    return (w1, b1, w2, b2, g1, be1, m1, v1, g2, be2, m2, v2)


def reference_forward(x, params):
    """Plain-JAX reference of the same eval-mode forward (sanity check)."""
    (w1, b1, w2, b2, g1, be1, m1, v1, g2, be2, m2, v2) = params
    B = x.shape[0]
    x = x.reshape(B, -1).astype(jnp.float32)
    F = x.shape[1]
    eps1 = BN_EPS1
    eps2 = float(F)   # same bn2-eps quirk as the PyTorch module
    y = jnp.maximum(x @ w1.T + b1, 0.0)
    x = (x + y - m1) / jnp.sqrt(v1 + eps1) * g1 + be1
    y = jnp.maximum(x @ w2.T + b2, 0.0)
    x = (x + y - m2) / jnp.sqrt(v2 + eps2) * g2 + be2
    return x


if __name__ == "__main__":
    key = jax.random.PRNGKey(0)
    k_x, k_p, k_x2, k_p2 = jax.random.split(key, 4)

    # ---- case 1: resident-weights path (input (8, 4, 8) -> flatten -> feat_dim 32) ----
    B, C, L = 8, 4, 8
    FEAT_DIM = C * L
    x = jax.random.normal(k_x, (B, C, L), jnp.float32)
    params = init_params(k_p, FEAT_DIM)
    prepared = prepare_dense_res_params(params)
    assert not prepared["stream"]
    out = jax.block_until_ready(dense_res_forward(x, prepared))
    ref = reference_forward(x, params)
    assert out.shape == (B, FEAT_DIM)
    err = float(jnp.max(jnp.abs(out - ref)))
    # bf16 activations/weights with f32 accumulation -> loosened tolerance vs f32 reference.
    assert jnp.allclose(out, ref, atol=5e-2, rtol=5e-2), f"resident path mismatch, max err {err}"

    # ---- case 2: force the weight-streaming fallback at a small shape ------------------
    B2, F2 = 16, 200          # Fp=256, tn=128 -> 2 column blocks per pass, 2 batch tiles
    x2 = jax.random.normal(k_x2, (B2, F2), jnp.float32)
    params2 = init_params(k_p2, F2)
    prepared2 = prepare_dense_res_params(params2, force_stream=True, stream_tn=128)
    out2 = jax.block_until_ready(dense_res_forward(x2, prepared2))
    ref2 = reference_forward(x2, params2)
    assert out2.shape == (B2, F2)
    err2 = float(jnp.max(jnp.abs(out2 - ref2)))
    assert jnp.allclose(out2, ref2, atol=5e-2, rtol=5e-2), f"streaming path mismatch, max err {err2}"

    print("KERNEL_OK")
</pallas_src>

<mosaic_0001>
module attributes {stable_mosaic.version = 11 : i64} {
  func.func @_dense_res_resident_kernel(%arg0: i32, %arg1: memref<8x128xbf16, #tpu.memory_space<vmem>>, %arg2: memref<128x128xbf16, #tpu.memory_space<vmem>>, %arg3: memref<128x128xbf16, #tpu.memory_space<vmem>>, %arg4: memref<8x128xf32, #tpu.memory_space<vmem>>, %arg5: memref<8x128xf32, #tpu.memory_space<vmem>>) attributes {dimension_semantics = [#tpu.dimension_semantics<parallel>], iteration_bounds = array<i64: 1>, scalar_prefetch = 0 : i64, scratch_operands = 0 : i64, tpu.core_type = #tpu.core_type<tc>, window_params = [{transform_indices = @transform_0, window_bounds = array<i64: 8, 128>}, {pipeline_mode = #tpu.pipeline_mode<synchronous>, transform_indices = @transform_1, window_bounds = array<i64: 128, 128>}, {pipeline_mode = #tpu.pipeline_mode<synchronous>, transform_indices = @transform_2, window_bounds = array<i64: 128, 128>}, {pipeline_mode = #tpu.pipeline_mode<synchronous>, transform_indices = @transform_3, window_bounds = array<i64: 8, 128>}, {transform_indices = @transform_4, window_bounds = array<i64: 8, 128>}]} {
    %c0 = arith.constant 0 : index
    %c0_0 = arith.constant 0 : index
    %0 = vector.load %arg1[%c0, %c0_0] : memref<8x128xbf16, #tpu.memory_space<vmem>>, vector<8x128xbf16>
    %1 = arith.extf %0 : vector<8x128xbf16> to vector<8x128xf32>
    %c0_1 = arith.constant 0 : index
    %c0_2 = arith.constant 0 : index
    %2 = vector.load %arg1[%c0_1, %c0_2] : memref<8x128xbf16, #tpu.memory_space<vmem>>, vector<8x128xbf16>
    %c0_3 = arith.constant 0 : index
    %c0_4 = arith.constant 0 : index
    %3 = vector.load %arg2[%c0_3, %c0_4] : memref<128x128xbf16, #tpu.memory_space<vmem>>, vector<128x128xbf16>
    %cst = arith.constant dense<0.000000e+00> : vector<8x128xf32>
    %4 = tpu.matmul %2, %3, %cst {dimension_numbers = #tpu.dot_dimension_numbers<[1], [0], [0], [1], [0, 0, 1, 1], [], []>} : vector<8x128xbf16>, vector<128x128xbf16>, vector<8x128xf32> -> vector<8x128xf32>
    %c0_5 = arith.constant 0 : index
    %c0_6 = arith.constant 0 : index
    %5 = vector.load %arg4[%c0_5, %c0_6] : memref<8x128xf32, #tpu.memory_space<vmem>>, vector<1x128xf32>
    %6 = vector.broadcast %5 : vector<1x128xf32> to vector<8x128xf32>
    %7 = arith.addf %4, %6 : vector<8x128xf32>
    %cst_7 = arith.constant 0.000000e+00 : f32
    %8 = vector.broadcast %cst_7 : f32 to vector<8x128xf32>
    %9 = arith.maximumf %7, %8 : vector<8x128xf32>
    %10 = arith.addf %1, %9 : vector<8x128xf32>
    %c1 = arith.constant 1 : index
    %c0_8 = arith.constant 0 : index
    %11 = vector.load %arg4[%c1, %c0_8] : memref<8x128xf32, #tpu.memory_space<vmem>>, vector<1x128xf32>
    %12 = vector.broadcast %11 : vector<1x128xf32> to vector<8x128xf32>
    %13 = arith.mulf %10, %12 : vector<8x128xf32>
    %c2 = arith.constant 2 : index
    %c0_9 = arith.constant 0 : index
    %14 = vector.load %arg4[%c2, %c0_9] : memref<8x128xf32, #tpu.memory_space<vmem>>, vector<1x128xf32>
    %15 = vector.broadcast %14 : vector<1x128xf32> to vector<8x128xf32>
    %16 = arith.addf %13, %15 : vector<8x128xf32>
    %17 = arith.truncf %16 : vector<8x128xf32> to vector<8x128xbf16>
    %c0_10 = arith.constant 0 : index
    %c0_11 = arith.constant 0 : index
    %18 = vector.load %arg3[%c0_10, %c0_11] : memref<128x128xbf16, #tpu.memory_space<vmem>>, vector<128x128xbf16>
    %cst_12 = arith.constant dense<0.000000e+00> : vector<8x128xf32>
    %19 = tpu.matmul %17, %18, %cst_12 {dimension_numbers = #tpu.dot_dimension_numbers<[1], [0], [0], [1], [0, 0, 1, 1], [], []>} : vector<8x128xbf16>, vector<128x128xbf16>, vector<8x128xf32> -> vector<8x128xf32>
    %c3 = arith.constant 3 : index
    %c0_13 = arith.constant 0 : index
    %20 = vector.load %arg4[%c3, %c0_13] : memref<8x128xf32, #tpu.memory_space<vmem>>, vector<1x128xf32>
    %21 = vector.broadcast %20 : vector<1x128xf32> to vector<8x128xf32>
    %22 = arith.addf %19, %21 : vector<8x128xf32>
    %cst_14 = arith.constant 0.000000e+00 : f32
    %23 = vector.broadcast %cst_14 : f32 to vector<8x128xf32>
    %24 = arith.maximumf %22, %23 : vector<8x128xf32>
    %25 = arith.addf %16, %24 : vector<8x128xf32>
    %c4 = arith.constant 4 : index
    %c0_15 = arith.constant 0 : index
    %26 = vector.load %arg4[%c4, %c0_15] : memref<8x128xf32, #tpu.memory_space<vmem>>, vector<1x128xf32>
    %27 = vector.broadcast %26 : vector<1x128xf32> to vector<8x128xf32>
    %28 = arith.mulf %25, %27 : vector<8x128xf32>
    %c5 = arith.constant 5 : index
    %c0_16 = arith.constant 0 : index
    %29 = vector.load %arg4[%c5, %c0_16] : memref<8x128xf32, #tpu.memory_space<vmem>>, vector<1x128xf32>
    %30 = vector.broadcast %29 : vector<1x128xf32> to vector<8x128xf32>
    %31 = arith.addf %28, %30 : vector<8x128xf32>
    %c0_17 = arith.constant 0 : index
    %c0_18 = arith.constant 0 : index
    %32 = vector.load %arg5[%c0_17, %c0_18] : memref<8x128xf32, #tpu.memory_space<vmem>>, vector<8x128xf32>
    tpu.vector_store %arg5[%c0_17, %c0_18], %31 {strides = array<i32>} : memref<8x128xf32, #tpu.memory_space<vmem>>, vector<8x128xf32>,
    return
  }
  func.func @transform_0(%arg0: i32) -> (i32, i32) {
    %c0_i32 = arith.constant 0 : i32
    %c0_i32_0 = arith.constant 0 : i32
    return %arg0, %c0_i32 : i32, i32
  }
  func.func @transform_1(%arg0: i32) -> (i32, i32) {
    %c0_i32 = arith.constant 0 : i32
    %c0_i32_0 = arith.constant 0 : i32
    %c0_i32_1 = arith.constant 0 : i32
    return %c0_i32, %c0_i32_0 : i32, i32
  }
  func.func @transform_2(%arg0: i32) -> (i32, i32) {
    %c0_i32 = arith.constant 0 : i32
    %c0_i32_0 = arith.constant 0 : i32
    %c0_i32_1 = arith.constant 0 : i32
    return %c0_i32, %c0_i32_0 : i32, i32
  }
  func.func @transform_3(%arg0: i32) -> (i32, i32) {
    %c0_i32 = arith.constant 0 : i32
    %c0_i32_0 = arith.constant 0 : i32
    %c0_i32_1 = arith.constant 0 : i32
    return %c0_i32, %c0_i32_0 : i32, i32
  }
  func.func @transform_4(%arg0: i32) -> (i32, i32) {
    %c0_i32 = arith.constant 0 : i32
    %c0_i32_0 = arith.constant 0 : i32
    return %arg0, %c0_i32 : i32, i32
  }
}

</mosaic_0001>

<llo_original>
// kernel: tpu_custom_call.1
$region0: #{tpu_custom_call.1}
  #allocation0 [shape = 'u32[]', space=smem, size = 0x4, offset = 0x4, fixed_abs, tag = 'smem constant byte address 0x4 - core index']
  #allocation1 [shape = 'u32[144,128]{1,0:T(1,128)}', space=vmem, size = 0x12000, scoped, tag = 'internal scratch']
  %s0 = inlined_call_operand.hbm [shape: bf16[8,128], index: 0, kind: input, shape index: {}]
  %s1 = inlined_call_operand.hbm [shape: bf16[128,128], index: 1, kind: input, shape index: {}]
  %s2 = inlined_call_operand.hbm [shape: bf16[128,128], index: 2, kind: input, shape index: {}]
  %s3 = inlined_call_operand.vmem [shape: f32[8,128], index: 3, kind: input, shape index: {}]
  %s4 = inlined_call_operand.hbm [shape: f32[8,128], index: 4, kind: output, shape index: {}]
  %s5 = sld [smem:[#allocation0]]
  $region38: #{tpu_custom_call.1} parent=0
    _
  %s7 = ssub.s32 1, %s5
  %s8 = scalar_select 0, %s7, %s5
  $region1: #{tpu_custom_call.1} parent=0
    #allocation2 [shape = 'u8[2048]{0}', space=vmem, size = 0x800, scoped, tag = 'input window, operand 0, single buffered']
    #allocation3 [shape = 's32[1]{0}', space=sflag, size = 0x4, scoped, tag = 'scoped memory for tpu_custom_call.1']
    #allocation4 [shape = 's32[1]{0}', space=sflag, size = 0x4, scoped, tag = 'scoped memory for tpu_custom_call.1']
    #allocation5 [shape = 'u8[32768]{0}', space=vmem, size = 0x8000, scoped, tag = 'input window, operand 1, single buffered']
    #allocation6 [shape = 's32[1]{0}', space=sflag, size = 0x4, scoped, tag = 'scoped memory for tpu_custom_call.1']
    #allocation7 [shape = 'u8[32768]{0}', space=vmem, size = 0x8000, scoped, tag = 'input window, operand 2, single buffered']
    #allocation8 [shape = 'u8[4096]{0}', space=vmem, size = 0x1000, scoped, tag = 'output window, operand 0, single buffered']
    %9 = vsyncpa [#allocation3], 0
    %10 = vsyncpa [#allocation6], 0
    %11 = vsyncpa [#allocation4], 0
    // Predicated region
    $region2: #{tpu_custom_call.1} parent=1 // pred_check
      _
    $region3: #{tpu_custom_call.1} parent=1 // pred_check_branch
      %13 = sbr.rel (0) target = $region5
    $region4: #{tpu_custom_call.1} parent=1 // pred_region
      %s15 = ssub.s32 64, 64
      %16 = vsyncadd [#allocation3], %s15
      %s18 = sshll.u32 [#allocation2], 4
      %s19 = int_to_ptr.vmem [resolvable:$true] %s18
      %21 = dma.hbm_to_vmem [thread:$0]  %s0, 64, %s19, [#allocation3]
    $region5: #{tpu_custom_call.1} parent=1 // pred_fallthru
      _
    // Predicated region
    $region6: #{tpu_custom_call.1} parent=1 // pred_check
      _
    $region7: #{tpu_custom_call.1} parent=1 // pred_check_branch
      %23 = sbr.rel (0) target = $region9
    $region8: #{tpu_custom_call.1} parent=1 // pred_region
      %s25 = ssub.s32 1024, 1024
      %26 = vsyncadd [#allocation6], %s25
      %s27 = sshll.u32 [#allocation5], 4
      %s28 = int_to_ptr.vmem [resolvable:$true] %s27
      %33 = dma.hbm_to_vmem [thread:$0]  %s1, 1024, %s28, [#allocation6], 64, 64, 4
    $region9: #{tpu_custom_call.1} parent=1 // pred_fallthru
      _
    // Predicated region
    $region10: #{tpu_custom_call.1} parent=1 // pred_check
      _
    $region11: #{tpu_custom_call.1} parent=1 // pred_check_branch
      %35 = sbr.rel (0) target = $region13
    $region12: #{tpu_custom_call.1} parent=1 // pred_region
      %s37 = ssub.s32 1024, 1024
      %38 = vsyncadd [#allocation6], %s37
      %s39 = sshll.u32 [#allocation7], 4
      %s40 = int_to_ptr.vmem [resolvable:$true] %s39
      %45 = dma.hbm_to_vmem [thread:$0]  %s2, 1024, %s40, [#allocation6], 64, 64, 4
    $region13: #{tpu_custom_call.1} parent=1 // pred_fallthru
      _
    // Predicated region
    $region14: #{tpu_custom_call.1} parent=1 // pred_check
      _
    $region15: #{tpu_custom_call.1} parent=1 // pred_check_branch
      %47 = sbr.rel (0) target = $region17
    $region16: #{tpu_custom_call.1} parent=1 // pred_region
      _
    $region17: #{tpu_custom_call.1} parent=1 // pred_fallthru
      _
    // Predicated region
    $region18: #{tpu_custom_call.1} parent=1 // pred_check
      _
    $region19: #{tpu_custom_call.1} parent=1 // pred_check_branch
      %49 = sbr.rel (0) target = $region21
    $region20: #{tpu_custom_call.1} parent=1 // pred_region
      %50 = dma.done [#allocation3], 64
    $region21: #{tpu_custom_call.1} parent=1 // pred_fallthru
      _
    // Predicated region
    $region22: #{tpu_custom_call.1} parent=1 // pred_check
      _
    $region23: #{tpu_custom_call.1} parent=1 // pred_check_branch
      %52 = sbr.rel (0) target = $region25
    $region24: #{tpu_custom_call.1} parent=1 // pred_region
      %53 = dma.done [#allocation6], 1024
    $region25: #{tpu_custom_call.1} parent=1 // pred_fallthru
      _
    // Predicated region
    $region26: #{tpu_custom_call.1} parent=1 // pred_check
      _
    $region27: #{tpu_custom_call.1} parent=1 // pred_check_branch
      %55 = sbr.rel (0) target = $region29
    $region28: #{tpu_custom_call.1} parent=1 // pred_region
      %56 = dma.done [#allocation6], 1024
    $region29: #{tpu_custom_call.1} parent=1 // pred_fallthru
      _
    %v58 = vld [vmem:[#allocation2] sm:$0xf]
    %v59 = vunpack.c.l.bf16 %v58
    %v60 = vld [vmem:[#allocation5] sm:$0xf]
    %v61 = vld [vmem:[#allocation5 + $0x4] sm:$0xf]
    %v62 = vld [vmem:[#allocation5 + $0x8] sm:$0xf]
    %v63 = vld [vmem:[#allocation5 + $0xc] sm:$0xf]
    %v64 = vld [vmem:[#allocation5 + $0x10] sm:$0xf]
    %v65 = vld [vmem:[#allocation5 + $0x14] sm:$0xf]
    %v66 = vld [vmem:[#allocation5 + $0x18] sm:$0xf]
    %v67 = vld [vmem:[#allocation5 + $0x1c] sm:$0xf]
    %v68 = vld [vmem:[#allocation5 + $0x20] sm:$0xf]
    %v69 = vld [vmem:[#allocation5 + $0x24] sm:$0xf]
    %v70 = vld [vmem:[#allocation5 + $0x28] sm:$0xf]
    %v71 = vld [vmem:[#allocation5 + $0x2c] sm:$0xf]
    %v72 = vld [vmem:[#allocation5 + $0x30] sm:$0xf]
    %v73 = vld [vmem:[#allocation5 + $0x34] sm:$0xf]
    %v74 = vld [vmem:[#allocation5 + $0x38] sm:$0xf]
    %v75 = vld [vmem:[#allocation5 + $0x3c] sm:$0xf]
    %v76 = vld [vmem:[%s3] sm:$0x1]
    %v77 = vlaneseq
    %v78 = vshrl.u32 %v77, 7
    %v79 = vsub.s32 0, %v78
    %v80 = vrot.slane %v76, %v79
    %v97 = vunpack.c.l.b16 %v60
    %v98 = vunpack.c.l.b16 %v61
    %v99 = vunpack.c.l.b16 %v62
    %v100 = vunpack.c.l.b16 %v63
    %v101 = vunpack.c.l.b16 %v64
    %v102 = vunpack.c.l.b16 %v65
    %v103 = vunpack.c.l.b16 %v66
    %v104 = vunpack.c.l.b16 %v67
    %v105 = vunpack.c.l.b16 %v68
    %v106 = vunpack.c.l.b16 %v69
    %v107 = vunpack.c.l.b16 %v70
    %v108 = vunpack.c.l.b16 %v71
    %v109 = vunpack.c.l.b16 %v72
    %v110 = vunpack.c.l.b16 %v73
    %v111 = vunpack.c.l.b16 %v74
    %v112 = vunpack.c.l.b16 %v75
    %v113 = vpack.c.b16 %v98, %v97
    %v114 = vpack.c.b16 %v100, %v99
    %v115 = vpack.c.b16 %v102, %v101
    %v116 = vpack.c.b16 %v104, %v103
    %v117 = vpack.c.b16 %v106, %v105
    %v118 = vpack.c.b16 %v108, %v107
    %v119 = vpack.c.b16 %v110, %v109
    %v120 = vpack.c.b16 %v112, %v111
    %129 = vmatprep.subr.bf16.mxu0 0
    %130 = vmatpush1.bf16.msra.mxu0 %v113
    %131 = vmatprep.subr.bf16.mxu0 0
    %132 = vmatpush1.bf16.msra.mxu0 %v114
    %133 = vmatprep.subr.bf16.mxu0 0
    %134 = vmatpush1.bf16.msra.mxu0 %v115
    %135 = vmatprep.subr.bf16.mxu0 0
    %136 = vmatpush1.bf16.msra.mxu0 %v116
    %137 = vmatprep.subr.bf16.mxu0 0
    %138 = vmatpush1.bf16.msra.mxu0 %v117
    %139 = vmatprep.subr.bf16.mxu0 0
    %140 = vmatpush1.bf16.msra.mxu0 %v118
    %141 = vmatprep.subr.bf16.mxu0 0
    %142 = vmatpush1.bf16.msra.mxu0 %v119
    %143 = vmatprep.subr.bf16.mxu0 0
    %144 = vmatpush1.bf16.msra.mxu0 %v120
    %145 = vmatprep.subr.bf16.mxu0 0
    %146 = vmatpush1.bf16.msra.mxu0 0
    %147 = vmatprep.subr.bf16.mxu0 0
    %148 = vmatpush1.bf16.msra.mxu0 0
    %149 = vmatprep.subr.bf16.mxu0 0
    %150 = vmatpush1.bf16.msra.mxu0 0
    %151 = vmatprep.subr.bf16.mxu0 0
    %152 = vmatpush1.bf16.msra.mxu0 0
    %153 = vmatprep.subr.bf16.mxu0 0
    %154 = vmatpush1.bf16.msra.mxu0 0
    %155 = vmatprep.subr.bf16.mxu0 0
    %156 = vmatpush1.bf16.msra.mxu0 0
    %157 = vmatprep.subr.bf16.mxu0 0
    %158 = vmatpush1.bf16.msra.mxu0 0
    %159 = vmatprep.subr.bf16.mxu0 0
    %160 = vmatpush1.bf16.msra.mxu0 0
    %161 = vmatprep.mubr.bf16.mxu0 0
    %162 = vmatmul.mubr.bf16.gmra.mrb[0].mxu0 %v58
    %v163 = vpop.f32.mrb[0].mxu0
    %v164 = vadd.f32 %v80, %v163
    %v165 = vpop.f32.mrb[0].mxu0
    %v166 = vpop.f32.mrb[0].mxu0
    %v167 = vpop.f32.mrb[0].mxu0
    %168 = vdwg.mxu0
    %v169 = vmax.f32 %v164, 0.0
    %v170 = vadd.f32 %v59, %v169
    %v171 = vld [vmem:[%s3 + $0x1] sm:$0x1]
    %v172 = vlaneseq
    %v173 = vshrl.u32 %v172, 7
    %v174 = vsub.s32 0, %v173
    %v175 = vrot.slane %v171, %v174
    %v176 = vmul.f32 %v170, %v175
    %v177 = vld [vmem:[%s3 + $0x2] sm:$0x1]
    %v178 = vlaneseq
    %v179 = vshrl.u32 %v178, 7
    %v180 = vsub.s32 0, %v179
    %v181 = vrot.slane %v177, %v180
    %v182 = vadd.f32 %v176, %v181
    %v183 = vpack.c.bf16 %v182, %v182
    %v184 = vld [vmem:[#allocation7] sm:$0xf]
    %v185 = vld [vmem:[#allocation7 + $0x4] sm:$0xf]
    %v186 = vld [vmem:[#allocation7 + $0x8] sm:$0xf]
    %v187 = vld [vmem:[#allocation7 + $0xc] sm:$0xf]
    %v188 = vld [vmem:[#allocation7 + $0x10] sm:$0xf]
    %v189 = vld [vmem:[#allocation7 + $0x14] sm:$0xf]
    %v190 = vld [vmem:[#allocation7 + $0x18] sm:$0xf]
    %v191 = vld [vmem:[#allocation7 + $0x1c] sm:$0xf]
    %v192 = vld [vmem:[#allocation7 + $0x20] sm:$0xf]
    %v193 = vld [vmem:[#allocation7 + $0x24] sm:$0xf]
    %v194 = vld [vmem:[#allocation7 + $0x28] sm:$0xf]
    %v195 = vld [vmem:[#allocation7 + $0x2c] sm:$0xf]
    %v196 = vld [vmem:[#allocation7 + $0x30] sm:$0xf]
    %v197 = vld [vmem:[#allocation7 + $0x34] sm:$0xf]
    %v198 = vld [vmem:[#allocation7 + $0x38] sm:$0xf]
    %v199 = vld [vmem:[#allocation7 + $0x3c] sm:$0xf]
    %v200 = vld [vmem:[%s3 + $0x3] sm:$0x1]
    %v201 = vlaneseq
    %v202 = vshrl.u32 %v201, 7
    %v203 = vsub.s32 0, %v202
    %v204 = vrot.slane %v200, %v203
    %v221 = vunpack.c.l.b16 %v184
    %v222 = vunpack.c.l.b16 %v185
    %v223 = vunpack.c.l.b16 %v186
    %v224 = vunpack.c.l.b16 %v187
    %v225 = vunpack.c.l.b16 %v188
    %v226 = vunpack.c.l.b16 %v189
    %v227 = vunpack.c.l.b16 %v190
    %v228 = vunpack.c.l.b16 %v191
    %v229 = vunpack.c.l.b16 %v192
    %v230 = vunpack.c.l.b16 %v193
    %v231 = vunpack.c.l.b16 %v194
    %v232 = vunpack.c.l.b16 %v195
    %v233 = vunpack.c.l.b16 %v196
    %v234 = vunpack.c.l.b16 %v197
    %v235 = vunpack.c.l.b16 %v198
    %v236 = vunpack.c.l.b16 %v199
    %v237 = vpack.c.b16 %v222, %v221
    %v238 = vpack.c.b16 %v224, %v223
    %v239 = vpack.c.b16 %v226, %v225
    %v240 = vpack.c.b16 %v228, %v227
    %v241 = vpack.c.b16 %v230, %v229
    %v242 = vpack.c.b16 %v232, %v231
    %v243 = vpack.c.b16 %v234, %v233
    %v244 = vpack.c.b16 %v236, %v235
    %253 = vmatprep.subr.bf16.mxu0 0
    %254 = vmatpush1.bf16.msra.mxu0 %v237
    %255 = vmatprep.subr.bf16.mxu0 0
    %256 = vmatpush1.bf16.msra.mxu0 %v238
    %257 = vmatprep.subr.bf16.mxu0 0
    %258 = vmatpush1.bf16.msra.mxu0 %v239
    %259 = vmatprep.subr.bf16.mxu0 0
    %260 = vmatpush1.bf16.msra.mxu0 %v240
    %261 = vmatprep.subr.bf16.mxu0 0
    %262 = vmatpush1.bf16.msra.mxu0 %v241
    %263 = vmatprep.subr.bf16.mxu0 0
    %264 = vmatpush1.bf16.msra.mxu0 %v242
    %265 = vmatprep.subr.bf16.mxu0 0
    %266 = vmatpush1.bf16.msra.mxu0 %v243
    %267 = vmatprep.subr.bf16.mxu0 0
    %268 = vmatpush1.bf16.msra.mxu0 %v244
    %269 = vmatprep.subr.bf16.mxu0 0
    %270 = vmatpush1.bf16.msra.mxu0 0
    %271 = vmatprep.subr.bf16.mxu0 0
    %272 = vmatpush1.bf16.msra.mxu0 0
    %273 = vmatprep.subr.bf16.mxu0 0
    %274 = vmatpush1.bf16.msra.mxu0 0
    %275 = vmatprep.subr.bf16.mxu0 0
    %276 = vmatpush1.bf16.msra.mxu0 0
    %277 = vmatprep.subr.bf16.mxu0 0
    %278 = vmatpush1.bf16.msra.mxu0 0
    %279 = vmatprep.subr.bf16.mxu0 0
    %280 = vmatpush1.bf16.msra.mxu0 0
    %281 = vmatprep.subr.bf16.mxu0 0
    %282 = vmatpush1.bf16.msra.mxu0 0
    %283 = vmatprep.subr.bf16.mxu0 0
    %284 = vmatpush1.bf16.msra.mxu0 0
    %285 = vmatprep.mubr.bf16.mxu0 0
    %286 = vmatmul.mubr.bf16.gmra.mrb[0].mxu0 %v183
    %v287 = vpop.f32.mrb[0].mxu0
    %v288 = vadd.f32 %v204, %v287
    %v289 = vpop.f32.mrb[0].mxu0
    %v290 = vpop.f32.mrb[0].mxu0
    %v291 = vpop.f32.mrb[0].mxu0
    %292 = vdwg.mxu0
    %v293 = vmax.f32 %v288, 0.0
    %v294 = vadd.f32 %v182, %v293
    %v295 = vld [vmem:[%s3 + $0x4] sm:$0x1]
    %v296 = vlaneseq
    %v297 = vshrl.u32 %v296, 7
    %v298 = vsub.s32 0, %v297
    %v299 = vrot.slane %v295, %v298
    %v300 = vmul.f32 %v294, %v299
    %v301 = vld [vmem:[%s3 + $0x5] sm:$0x1]
    %v302 = vlaneseq
    %v303 = vshrl.u32 %v302, 7
    %v304 = vsub.s32 0, %v303
    %v305 = vrot.slane %v301, %v304
    %v306 = vadd.f32 %v300, %v305
    %307 = vst [vmem:[#allocation8] sm:$0xff] %v306
    // Predicated region
    $region30: #{tpu_custom_call.1} parent=1 // pred_check
      _
    $region31: #{tpu_custom_call.1} parent=1 // pred_check_branch
      %309 = sbr.rel (0) target = $region33
    $region32: #{tpu_custom_call.1} parent=1 // pred_region
      %s311 = ssub.s32 128, 128
      %312 = vsyncadd [#allocation4], %s311
      %s314 = sshll.u32 [#allocation8], 4
      %s315 = int_to_ptr.vmem [resolvable:$true] %s314
      %317 = dma.vmem_to_hbm [thread:$0]  %s315, 128, %s4, [#allocation4]
    $region33: #{tpu_custom_call.1} parent=1 // pred_fallthru
      _
    // Predicated region
    $region34: #{tpu_custom_call.1} parent=1 // pred_check
      _
    $region35: #{tpu_custom_call.1} parent=1 // pred_check_branch
      %319 = sbr.rel (0) target = $region37
    $region36: #{tpu_custom_call.1} parent=1 // pred_region
      %320 = dma.done [#allocation4], 128
    $region37: #{tpu_custom_call.1} parent=1 // pred_fallthru
      _
    %321 = vsyncpa [#allocation3], 1
    %322 = vsyncpa [#allocation6], 1
    %323 = vsyncpa [#allocation4], 1

</llo_original>
